<compile_context>
chip_gen: v7x
topology: tpu7x:2x2x1
jax: 0.10.0
libtpu: 0.0.40
codegen_flags: <defaults>
</compile_context>

<pallas_src>
from functools import partial

import numpy as np
import jax
import jax.numpy as jnp
from jax import lax
from jax.experimental import pallas as pl
from jax.experimental.pallas import tpu as pltpu


# ---------------------------------------------------------------------------
# trace-time tiling helpers
# ---------------------------------------------------------------------------
def _largest_divisor_tile(total, cap, multiple=1):
    """Largest divisor of `total` that is <= cap and a multiple of `multiple`.
    Falls back to `total` (full dim -- always legal as a block dim)."""
    cap = min(cap, total)
    if cap >= total:
        return total
    for d in range(cap, 0, -1):
        if total % d == 0 and d % multiple == 0:
            return d
    return total


# ---------------------------------------------------------------------------
# Pallas kernels
# ---------------------------------------------------------------------------
def _binarize_pred_kernel(x_ref, o_ref):
    """argmax over classes -> one-hot binary maps.
    Blocks: in (1, C, THW), out (1, C, THW); THW is lane-dense.
    No softmax: argmax on logits is identical (monotonic map)."""
    x = x_ref[0]                                            # (C, THW) f32
    c_dim = x.shape[0]
    m = jnp.max(x, axis=0, keepdims=True)                   # (1, THW)
    cls = lax.broadcasted_iota(jnp.int32, x.shape, 0)       # (C, THW)
    # first-index argmax (torch tie behavior)
    am = jnp.min(jnp.where(x == m, cls, c_dim), axis=0, keepdims=True)
    o_ref[0] = (cls == am).astype(jnp.float32)


def _binarize_target_kernel(t_ref, o_ref):
    """(class_map == c) one-hot binary maps. Blocks: in (1, 1, THW), out (1, C, THW)."""
    t = t_ref[0].astype(jnp.int32)                          # (1, THW)
    c_dim, thw = o_ref.shape[1], o_ref.shape[2]
    cls = lax.broadcasted_iota(jnp.int32, (c_dim, thw), 0)  # (C, THW)
    o_ref[0] = (t == cls).astype(jnp.float32)


def _shift(x, d, axis):
    """Zero-filled static shift along `axis`: out[i] = x[i - d], 0 outside."""
    if d == 0:
        return x
    n = x.shape[axis]
    pad_shape = list(x.shape)
    pad_shape[axis] = abs(d)
    zeros = jnp.zeros(pad_shape, x.dtype)
    if d > 0:
        body = lax.slice_in_dim(x, 0, n - d, axis=axis)
        return jnp.concatenate([zeros, body], axis=axis)
    body = lax.slice_in_dim(x, -d, n, axis=axis)
    return jnp.concatenate([body, zeros], axis=axis)


def _window_sum(x, p):
    """Separable zero-padded (2p+1)x(2p+1) all-ones box sum via shift-and-add.
    Exact for 0/1 maps; ~K*H*W VPU work per map (no MXU, no band matrices)."""
    row = x
    for d in range(1, p + 1):
        row = row + _shift(x, d, axis=2) + _shift(x, -d, axis=2)
    s = row
    for d in range(1, p + 1):
        s = s + _shift(row, d, axis=1) + _shift(row, -d, axis=1)
    return s


def _morph_chain_kernel(x_ref, er_ref, di_ref, cur_e_ref, cur_d_ref, *, kernel_size):
    """Fused erosion + dilation chains.

    grid = (n_tiles, T).  The running erode / dilate maps are carried in VMEM
    scratch across the inner T axis; step t writes the maps after (t+1)
    applications into output block (t, n).  Whole-block vectorized ops, one
    full-block store per output (no per-map unroll).
    """
    t = pl.program_id(1)
    p = kernel_size // 2
    full = float(kernel_size * kernel_size)

    @pl.when(t == 0)
    def _():
        cur_e_ref[...] = x_ref[...]
        cur_d_ref[...] = x_ref[...]

    s_e = _window_sum(cur_e_ref[...], p)
    new_e = (s_e >= full - 0.5).astype(jnp.float32)          # erode
    cur_e_ref[...] = new_e
    er_ref[0] = new_e.astype(er_ref.dtype)

    s_d = _window_sum(cur_d_ref[...], p)
    new_d = (s_d > 0.5).astype(jnp.float32)                  # dilate
    cur_d_ref[...] = new_d
    di_ref[0] = new_d.astype(di_ref.dtype)


# ---------------------------------------------------------------------------
# Pallas wrappers
# ---------------------------------------------------------------------------
@jax.jit
def binarize_pred(predictions):
    B, C, H, W = predictions.shape
    hw = H * W
    x = predictions.reshape(B, C, hw).astype(jnp.float32)
    tile_hw = _largest_divisor_tile(hw, max(128, (1 << 19) // max(C, 1)), multiple=128)
    out = pl.pallas_call(
        _binarize_pred_kernel,
        out_shape=jax.ShapeDtypeStruct((B, C, hw), jnp.float32),
        grid=(B, hw // tile_hw),
        in_specs=[pl.BlockSpec((1, C, tile_hw), lambda b, h: (b, 0, h))],
        out_specs=pl.BlockSpec((1, C, tile_hw), lambda b, h: (b, 0, h)),
        compiler_params=pltpu.CompilerParams(
            dimension_semantics=("parallel", "parallel")),
    )(x)
    return out.reshape(B, C, H, W)


@partial(jax.jit, static_argnames=("num_classes",))
def binarize_target(targets, num_classes):
    B, H, W = targets.shape
    hw = H * W
    t = targets.reshape(B, 1, hw).astype(jnp.int32)
    tile_hw = _largest_divisor_tile(hw, max(128, (1 << 19) // max(num_classes, 1)),
                                    multiple=128)
    out = pl.pallas_call(
        _binarize_target_kernel,
        out_shape=jax.ShapeDtypeStruct((B, num_classes, hw), jnp.float32),
        grid=(B, hw // tile_hw),
        in_specs=[pl.BlockSpec((1, 1, tile_hw), lambda b, h: (b, 0, h))],
        out_specs=pl.BlockSpec((1, num_classes, tile_hw), lambda b, h: (b, 0, h)),
        compiler_params=pltpu.CompilerParams(
            dimension_semantics=("parallel", "parallel")),
    )(t)
    return out.reshape(B, num_classes, H, W)


@partial(jax.jit, static_argnames=("num_steps", "kernel_size"))
def morph_chains(binary_maps, num_steps, kernel_size):
    """ONE pallas_call computing both chains:
       erode_stack[t] = erode^(t+1)(maps), dilate_stack[t] = dilate^(t+1)(maps)."""
    NB, C, H, W = binary_maps.shape
    N = NB * C
    x = binary_maps.reshape(N, H, W).astype(jnp.float32)
    # VMEM budget per grid step: ~ (2x in dbl-buf + 2 scratch)*4B + (2 out * 2 buf)*2B
    #   = 24 bytes / element  ->  keep TILE_N*H*W <= ~1M elements (~24 MiB).
    tile_n = _largest_divisor_tile(N, max(1, (1 << 20) // (H * W)), multiple=1)
    n_tiles = N // tile_n
    er, di = pl.pallas_call(
        partial(_morph_chain_kernel, kernel_size=kernel_size),
        out_shape=(jax.ShapeDtypeStruct((num_steps, N, H, W), jnp.bfloat16),
                   jax.ShapeDtypeStruct((num_steps, N, H, W), jnp.bfloat16)),
        grid=(n_tiles, num_steps),
        in_specs=[pl.BlockSpec((tile_n, H, W), lambda n, t: (n, 0, 0))],
        out_specs=(pl.BlockSpec((1, tile_n, H, W), lambda n, t: (t, n, 0, 0)),
                   pl.BlockSpec((1, tile_n, H, W), lambda n, t: (t, n, 0, 0))),
        scratch_shapes=[pltpu.VMEM((tile_n, H, W), jnp.float32),
                        pltpu.VMEM((tile_n, H, W), jnp.float32)],
        compiler_params=pltpu.CompilerParams(
            dimension_semantics=("parallel", "arbitrary"),
            vmem_limit_bytes=48 * 1024 * 1024),
    )(x)
    return (er.reshape(num_steps, NB, C, H, W),
            di.reshape(num_steps, NB, C, H, W))


# ---------------------------------------------------------------------------
# Host-side barcode computation (mirrors the PyTorch reference)
# TODO(synk): DFS connected-component labeling + set-based component matching
# are data-dependent, sequential host algorithms with no clean Pallas
# equivalent; kept in NumPy/Python.
# ---------------------------------------------------------------------------
def _find_components_dfs(binary_map):
    H, W = binary_map.shape
    visited = np.zeros((H, W), dtype=bool)
    components = []
    fg = binary_map == 1
    while True:
        idx = np.argwhere(fg & ~visited)
        if idx.shape[0] == 0:
            break
        i, j = int(idx[0][0]), int(idx[0][1])
        stack = [(i, j)]
        comp = []
        while stack:
            cx, cy = stack.pop()
            if not (0 <= cx < H and 0 <= cy < W) or visited[cx, cy] or binary_map[cx, cy] == 0:
                continue
            visited[cx, cy] = True
            comp.append((cx, cy))
            stack.extend([(cx - 1, cy), (cx + 1, cy), (cx, cy - 1), (cx, cy + 1)])
        if comp:
            components.append(comp)
    components.sort(key=len, reverse=True)
    return components


def _match_component(comp, previous_components):
    comp_set = set(comp)
    best_id, best_union = None, 0
    for comp_id, prev_set in previous_components.items():
        union = len(comp_set & prev_set)
        if union > best_union and union > 0.5 * min(len(comp_set), len(prev_set)):
            best_id, best_union = comp_id, union
    return best_id


def _accumulate_barcodes(binary_maps_np, barcodes, previous_components, iteration, max_iter):
    B, C = binary_maps_np.shape[:2]
    for b in range(B):
        for c in range(C):
            components = _find_components_dfs(binary_maps_np[b, c])
            for component in components:
                match = _match_component(component, previous_components[b][c])
                if match is None:
                    key = len(previous_components[b][c])
                    barcodes[b][c][key] = np.zeros(max_iter, dtype=np.float32)
                    barcodes[b][c][key][iteration] = len(component)
                    previous_components[b][c][key] = set(component)
                else:
                    barcodes[b][c][match][iteration] = len(component)
    return barcodes, previous_components


def _topological_loss(barcode_pred, barcode_target, batch_size):
    losses = np.zeros(batch_size, dtype=np.float32)
    for b, bbp in barcode_pred.items():
        for c, bcp in bbp.items():
            for i, comp_p in bcp.items():
                comp_t = barcode_target[b][c].get(i, None)
                if comp_t is not None:
                    losses[b] += np.abs(comp_p / comp_p.sum() - comp_t / comp_t.sum()).sum()
                else:
                    losses[b] += np.abs(comp_p / comp_p.sum()).sum()
    return losses


# ---------------------------------------------------------------------------
# Forward pass (matches TopologicalLoss.forward with default hyperparams)
# ---------------------------------------------------------------------------
def topological_loss_forward(predictions, targets, *, max_iter=5, kernel_size=3,
                             weight_components=1.0, reduction="none"):
    B, C, H, W = predictions.shape
    T = max_iter // 2
    half = max_iter // 2

    # ---- enqueue ALL device work first (async dispatch) ---------------------
    bin_pred = binarize_pred(predictions)                    # Pallas kernel
    bin_tgt = binarize_target(targets, C)                    # Pallas kernel
    if T > 0:
        combined = jnp.concatenate([bin_pred, bin_tgt], axis=0)   # (2B, C, H, W)
        er_stack, di_stack = morph_chains(combined, T, kernel_size)  # 1 fused call

    # ---- pull the (small) base maps and run their barcode pass while the
    #      fused morph chains are still executing on device -------------------
    bin_pred_np = np.asarray(bin_pred)
    bin_tgt_np = np.asarray(bin_tgt)

    barc_p = {b: {c: {} for c in range(C)} for b in range(B)}
    prev_p = {b: {c: {} for c in range(C)} for b in range(B)}
    barc_t = {b: {c: {} for c in range(C)} for b in range(B)}
    prev_t = {b: {c: {} for c in range(C)} for b in range(B)}

    barc_p, prev_p = _accumulate_barcodes(bin_pred_np, barc_p, prev_p, half, max_iter)
    barc_t, prev_t = _accumulate_barcodes(bin_tgt_np, barc_t, prev_t, half, max_iter)

    if T > 0:
        # bf16 stacks -> half-size device->host transfer; widen on host.
        er_np = np.asarray(er_stack).astype(np.float32)      # (T, 2B, C, H, W)
        di_np = np.asarray(di_stack).astype(np.float32)
        for t in range(T):                                   # erosion iterations
            barc_p, prev_p = _accumulate_barcodes(er_np[t, :B], barc_p, prev_p,
                                                  half + t + 1, max_iter)
            barc_t, prev_t = _accumulate_barcodes(er_np[t, B:], barc_t, prev_t,
                                                  half + t + 1, max_iter)
        for t in range(T):                                   # dilation iterations
            barc_p, prev_p = _accumulate_barcodes(di_np[t, :B], barc_p, prev_p,
                                                  half - t - 1, max_iter)
            barc_t, prev_t = _accumulate_barcodes(di_np[t, B:], barc_t, prev_t,
                                                  half - t - 1, max_iter)

    losses = jnp.asarray(_topological_loss(barc_p, barc_t, B))

    if reduction == "mean":
        return losses.mean()
    if reduction == "sum":
        return losses.sum()
    return losses  # 'none'


if __name__ == "__main__":
    key = jax.random.PRNGKey(0)
    k1, k2 = jax.random.split(key)
    B, C, H, W = 2, 4, 16, 16
    predictions = jax.random.normal(k1, (B, C, H, W), dtype=jnp.float32)
    targets = jax.random.randint(k2, (B, H, W), 0, C, dtype=jnp.int32)

    losses = topological_loss_forward(predictions, targets)
    losses = jax.block_until_ready(losses)
    assert losses.shape == (B,)
    print("KERNEL_OK")
</pallas_src>

<mosaic_0001>
module attributes {stable_mosaic.version = 11 : i64} {
  func.func @_binarize_pred_kernel(%arg0: i32, %arg1: i32, %arg2: memref<1x4x256xf32, #tpu.memory_space<vmem>>, %arg3: memref<1x4x256xf32, #tpu.memory_space<vmem>>) attributes {dimension_semantics = [#tpu.dimension_semantics<parallel>, #tpu.dimension_semantics<parallel>], iteration_bounds = array<i64: 2, 1>, scalar_prefetch = 0 : i64, scratch_operands = 0 : i64, tpu.core_type = #tpu.core_type<tc>, window_params = [{transform_indices = @transform_0, window_bounds = array<i64: 1, 4, 256>}, {transform_indices = @transform_1, window_bounds = array<i64: 1, 4, 256>}]} {
    %c0 = arith.constant 0 : index
    %c0_0 = arith.constant 0 : index
    %c0_1 = arith.constant 0 : index
    %0 = vector.load %arg2[%c0, %c0_0, %c0_1] : memref<1x4x256xf32, #tpu.memory_space<vmem>>, vector<1x4x256xf32>
    %1 = vector.shape_cast %0 : vector<1x4x256xf32> to vector<4x256xf32>
    %cst = arith.constant dense<0xFF800000> : vector<256xf32>
    %2 = vector.multi_reduction <maximumf>, %1, %cst [0] : vector<4x256xf32> to vector<256xf32>
    %3 = vector.shape_cast %2 : vector<256xf32> to vector<1x256xf32>
    %4 = tpu.iota {dimensions = array<i32: 0>} : vector<4x256xi32>
    %5 = vector.broadcast %3 : vector<1x256xf32> to vector<4x256xf32>
    %6 = arith.cmpf oeq, %1, %5 : vector<4x256xf32>
    %c4_i32 = arith.constant 4 : i32
    %7 = vector.broadcast %c4_i32 : i32 to vector<4x256xi32>
    %8 = arith.select %6, %4, %7 : vector<4x256xi1>, vector<4x256xi32>
    %cst_2 = arith.constant dense<2147483647> : vector<256xi32>
    %9 = vector.multi_reduction <minsi>, %8, %cst_2 [0] : vector<4x256xi32> to vector<256xi32>
    %10 = vector.shape_cast %9 : vector<256xi32> to vector<1x256xi32>
    %11 = vector.broadcast %10 : vector<1x256xi32> to vector<4x256xi32>
    %12 = arith.cmpi eq, %4, %11 : vector<4x256xi32>
    %13 = arith.extui %12 : vector<4x256xi1> to vector<4x256xi32>
    %14 = arith.sitofp %13 : vector<4x256xi32> to vector<4x256xf32>
    %c0_3 = arith.constant 0 : index
    %c0_4 = arith.constant 0 : index
    %c0_5 = arith.constant 0 : index
    %15 = vector.load %arg3[%c0_3, %c0_4, %c0_5] : memref<1x4x256xf32, #tpu.memory_space<vmem>>, vector<1x4x256xf32>
    %16 = vector.shape_cast %15 : vector<1x4x256xf32> to vector<4x256xf32>
    %17 = vector.shape_cast %14 : vector<4x256xf32> to vector<1x4x256xf32>
    tpu.vector_store %arg3[%c0_3, %c0_4, %c0_5], %17 {strides = array<i32>} : memref<1x4x256xf32, #tpu.memory_space<vmem>>, vector<1x4x256xf32>,
    return
  }
  func.func @transform_0(%arg0: i32, %arg1: i32) -> (i32, i32, i32) {
    %c0_i32 = arith.constant 0 : i32
    %c0_i32_0 = arith.constant 0 : i32
    return %arg0, %c0_i32, %arg1 : i32, i32, i32
  }
  func.func @transform_1(%arg0: i32, %arg1: i32) -> (i32, i32, i32) {
    %c0_i32 = arith.constant 0 : i32
    %c0_i32_0 = arith.constant 0 : i32
    return %arg0, %c0_i32, %arg1 : i32, i32, i32
  }
}

</mosaic_0001>

<llo_original>
// kernel: binarize_pred.1
$region0: #{binarize_pred.1}
  #allocation0 [shape = 'u32[]', space=smem, size = 0x4, offset = 0x4, fixed_abs, tag = 'smem constant byte address 0x4 - core index']
  #allocation1 [shape = 'u32[144,128]{1,0:T(1,128)}', space=vmem, size = 0x12000, scoped, tag = 'internal scratch']
  %s0 = inlined_call_operand.vmem [shape: f32[2,4,256], index: 0, kind: input, shape index: {}]
  %s1 = inlined_call_operand.vmem [shape: f32[2,4,256], index: 1, kind: output, shape index: {}]
  %s2 = sld [smem:[#allocation0]]
  $region37: #{binarize_pred.1} parent=0
    _
  %s4 = ssub.s32 1, %s2
  %s5 = scalar_select 0, %s4, %s2
  loop: start=0, step=1, limit=4
  $region2: #{binarize_pred.1} parent=0 // loop_pre_header
    _
  $region3: #{binarize_pred.1} parent=0 // loop_header
    %s7 = sphi 0, %s11
    %p8 = scmp.ge.s32.totalorder %s7, 4
    %s14 = sphi 0, %s26
    %s15 = sphi 0, %s22
    %s16 = sphi 0, %s14
    %s17 = sphi 0, %s15
    %s18 = sphi 0, %s16
    %s19 = sphi 0, %s17
    %s31 = sphi 0, %s33
    %s34 = sphi 0, %s31
    %s35 = sphi 0, %s34
    %s51 = sphi 0, %s35
    %s59 = sphi 0, %s61
    %s62 = sphi 0, %s59
    %s63 = sphi 0, %s62
    %s79 = sphi 0, %s63
  $region4: #{binarize_pred.1} parent=0 // loop_header_branch
    %10 = sbr.rel (%p8) target = $region8
  $region5: #{binarize_pred.1} parent=0 // loop_body
    %s12 = ssub.s32 %s7, 1
    %s13 = ssub.s32 %s7, 2
    %s20 = sadd.s32 1, %s15
    %p21 = scmp.ge.s32.totalorder %s20, 1
    %s22 = scalar_select %p21, 0, %s20
    %s23 = sadd.s32 1, %s14
    %s24 = scalar_select %p21, %s23, %s14
    %p25 = scmp.ge.s32.totalorder %s24, 2
    %s26 = scalar_select %p25, 0, %s24
    %s27 = ssub.s32 %s14, %s26
    %s28 = ssub.s32 %s15, %s22
    %s29 = sor.u32 %s27, %s28
    %p30 = scmp.eq.s32.totalorder %s29, 0
    %s32 = sadd.s32 %s31, 1
    %s33 = scalar_select %p30, %s31, %s32
    %p36 = pneg %p30
    %p37 = scmp.eq.s32.totalorder %s7, 1
    %p38 = por %p36, %p37
    %p39 = scmp.ne.s32.totalorder %s31, %s34
    %p40 = scmp.eq.s32.totalorder %s7, 0
    %p41 = por %p39, %p40
    %p42 = scmp.ne.s32.totalorder %s31, %s34
    %p43 = scmp.eq.s32.totalorder %s12, 1
    %p44 = por %p42, %p43
    %p45 = scmp.ne.s32.totalorder %s34, %s35
    %p46 = scmp.eq.s32.totalorder %s12, 0
    %p47 = por %p45, %p46
    %p48 = scmp.ne.s32.totalorder %s34, %s35
    %p49 = scmp.eq.s32.totalorder %s13, 1
    %p50 = por %p48, %p49
    %p52 = scmp.ne.s32.totalorder %s35, %s51
    %p53 = scmp.eq.s32.totalorder %s13, 0
    %p54 = por %p52, %p53
    %s55 = ssub.s32 %s14, %s26
    %s56 = ssub.s32 %s15, %s22
    %s57 = sor.u32 %s55, %s56
    %p58 = scmp.eq.s32.totalorder %s57, 0
    %s60 = sadd.s32 %s59, 1
    %s61 = scalar_select %p58, %s59, %s60
    %p64 = pneg %p58
    %p65 = scmp.eq.s32.totalorder %s7, 1
    %p66 = por %p64, %p65
    %p67 = scmp.ne.s32.totalorder %s59, %s62
    %p68 = scmp.eq.s32.totalorder %s7, 0
    %p69 = por %p67, %p68
    %p70 = scmp.ne.s32.totalorder %s59, %s62
    %p71 = scmp.eq.s32.totalorder %s12, 1
    %p72 = por %p70, %p71
    %p73 = scmp.ne.s32.totalorder %s62, %s63
    %p74 = scmp.eq.s32.totalorder %s12, 0
    %p75 = por %p73, %p74
    %p76 = scmp.ne.s32.totalorder %s62, %s63
    %p77 = scmp.eq.s32.totalorder %s13, 1
    %p78 = por %p76, %p77
    %p80 = scmp.ne.s32.totalorder %s63, %s79
    %p81 = scmp.eq.s32.totalorder %s13, 0
    %p82 = por %p80, %p81
    %p83 = scmp.le.s32.totalorder 1, %s7
    %p84 = scmp.lt.s32.totalorder %s7, 3
    %p85 = pnand %p83, %p84
    %p86 = pneg %p85
    // Predicated region
    $region9: #{binarize_pred.1} parent=5 // pred_check
      _
    $region10: #{binarize_pred.1} parent=5 // pred_check_branch
      %88 = sbr.rel (%p85) target = $region12
    $region11: #{binarize_pred.1} parent=5 // pred_region
      %s89 = ssub.s32 %s7, 1
    $region12: #{binarize_pred.1} parent=5 // pred_fallthru
      _
    %p90 = scmp.lt.s32.totalorder %s7, 2
    // Predicated region
    $region13: #{binarize_pred.1} parent=5 // pred_check
      %p91 = pneg %p90
    $region14: #{binarize_pred.1} parent=5 // pred_check_branch
      %93 = sbr.rel (%p91) target = $region16
    $region15: #{binarize_pred.1} parent=5 // pred_region
      // Predicated region
      $region17: #{binarize_pred.1} parent=15 // pred_check
        %p94 = pneg %p41
      $region18: #{binarize_pred.1} parent=15 // pred_check_branch
        %96 = sbr.rel (%p94) target = $region20
      $region19: #{binarize_pred.1} parent=15 // pred_region
        %s97 = smul.u32 2, %s15
        %p98 = scmp.lt.s32.totalorder %s14, 1
        %s99 = scalar_select %p98, %s14, 1
        %p100 = scmp.lt.s32.totalorder %s97, 1
        %s101 = scalar_select %p100, %s97, 1
        %s102 = smul.addr %s99, 2
        %s103 = sadd.s32 %s101, %s102
        %s104 = smul.addr %s103, 4
        %s105 = scalar_lea.vmem %s0, %s104
        %s106 = smul.u32 2, %s15
      $region20: #{binarize_pred.1} parent=15 // pred_fallthru
        _
    $region16: #{binarize_pred.1} parent=5 // pred_fallthru
      _
    %p107 = scmp.le.s32.totalorder 1, %s7
    %p108 = scmp.lt.s32.totalorder %s7, 3
    %p109 = pnand %p107, %p108
    %p110 = pneg %p109
    // Predicated region
    $region21: #{binarize_pred.1} parent=5 // pred_check
      _
    $region22: #{binarize_pred.1} parent=5 // pred_check_branch
      %112 = sbr.rel (%p109) target = $region24
    $region23: #{binarize_pred.1} parent=5 // pred_region
      %s113 = ssub.s32 %s7, 1
      %s114 = smul.u32 2, %s17
      %p115 = scmp.lt.s32.totalorder %s16, 1
      %s116 = scalar_select %p115, %s16, 1
      %p117 = scmp.lt.s32.totalorder %s114, 1
      %s118 = scalar_select %p117, %s114, 1
      %s119 = smul.addr %s116, 2
      %s120 = sadd.s32 %s118, %s119
      %s121 = smul.addr %s120, 4
      %s122 = scalar_lea.vmem %s0, %s121
      %p123 = pneg %p47
      %p124 = pneg %p44
      %p125 = pneg %p75
      %p126 = pneg %p72
      %s127 = smul.u32 2, %s17
      %p128 = scmp.lt.s32.totalorder %s16, 1
      %s129 = scalar_select %p128, %s16, 1
      %p130 = scmp.lt.s32.totalorder %s127, 1
      %s131 = scalar_select %p130, %s127, 1
      %s132 = smul.addr %s129, 2
      %s133 = sadd.s32 %s131, %s132
      %s134 = smul.addr %s133, 4
      %s135 = scalar_lea.vmem %s1, %s134
      %s136 = smul.u32 2, %s17
      %p137 = scmp.lt.s32.totalorder %s16, 1
      %s138 = scalar_select %p137, %s16, 1
      %p139 = scmp.lt.s32.totalorder %s136, 1
      %s140 = scalar_select %p139, %s136, 1
      %s141 = smul.addr %s138, 2
      %s142 = sadd.s32 %s140, %s141
      %s143 = smul.addr %s142, 4
      %s144 = scalar_lea.vmem %s0, %s143
      %s145 = smul.u32 2, %s17
      %s146 = smul.u32 2, %s17
      %p147 = scmp.lt.s32.totalorder %s16, 1
      %s148 = scalar_select %p147, %s16, 1
      %p149 = scmp.lt.s32.totalorder %s146, 1
      %s150 = scalar_select %p149, %s146, 1
      %s151 = smul.addr %s148, 2
      %s152 = sadd.s32 %s150, %s151
      %s153 = smul.addr %s152, 4
      %s154 = scalar_lea.vmem %s1, %s153
      %s155 = smul.u32 2, %s17
      %v156 = vld [vmem:[%s144] sm:$0xff]
      %v158 = vcombine.high %v156, %v156
      %vm160 = vcmask 1043456
      %v161 = vsel %vm160, %v156, -inf
      %v162 = vrot.slane %v161, 4
      %v163 = vmax.f32 %v161, %v162
      %v164 = vrot.slane %v163, 2
      %v165 = vmax.f32 %v163, %v164
      %v166 = vrot.slane %v165, 1
      %v167 = vmax.f32 %v165, %v166
      %v168 = vsel %vm160, %v158, -inf
      %v169 = vrot.slane %v168, 4
      %v170 = vmax.f32 %v168, %v169
      %v171 = vrot.slane %v170, 2
      %v172 = vmax.f32 %v170, %v171
      %v173 = vrot.slane %v172, 1
      %v174 = vmax.f32 %v172, %v173
      %v175 = vlaneseq
      %v176 = vshrl.u32 %v175, 7
      %v179 = vcombine.low %v167, %v174
      %vm181 = vcmp.eq.f32.partialorder %v156, %v179
      %v183 = vunpack.c.l.s4 839922192
      %v184 = vunpack.c.0.s8 %v183
      %v185 = vlaneseq
      %v186 = vshrl.u32 %v185, 7
      %v187 = vsub.s32 %v184, %v186
      %v188 = vrot.slane %v176, %v187
      %v189 = vsel %vm181, %v188, 4
      %v190 = vcombine.high %v189, %v189
      %v191 = vsel %vm160, %v189, 2147483647
      %v192 = vrot.slane %v191, 4
      %vm193 = vcmp.lt.s32.totalorder %v191, %v192
      %v194 = vsel %vm193, %v191, %v192
      %v195 = vrot.slane %v194, 2
      %vm196 = vcmp.lt.s32.totalorder %v194, %v195
      %v197 = vsel %vm196, %v194, %v195
      %v198 = vrot.slane %v197, 1
      %vm199 = vcmp.lt.s32.totalorder %v197, %v198
      %v200 = vsel %vm199, %v197, %v198
      %v201 = vsel %vm160, %v190, 2147483647
      %v202 = vrot.slane %v201, 4
      %vm203 = vcmp.lt.s32.totalorder %v201, %v202
      %v204 = vsel %vm203, %v201, %v202
      %v205 = vrot.slane %v204, 2
      %vm206 = vcmp.lt.s32.totalorder %v204, %v205
      %v207 = vsel %vm206, %v204, %v205
      %v208 = vrot.slane %v207, 1
      %vm209 = vcmp.lt.s32.totalorder %v207, %v208
      %v210 = vsel %vm209, %v207, %v208
      %vm211 = vcmp.eq.s32.totalorder %v176, %v200
      %vm212 = vcmp.eq.s32.totalorder %v176, %v210
      %v213 = vsel %vm211, 1, 0
      %v214 = vsel %vm212, 1, 0
      %v215 = vcvt.s32.f32 %v213
      %v216 = vcvt.s32.f32 %v214
      %v219 = vcombine.low %v215, %v216
      %221 = vst [vmem:[%s154] sm:$0xff] %v219
      %s222 = smul.u32 2, %s17
      %p223 = scmp.lt.s32.totalorder %s16, 1
      %s224 = scalar_select %p223, %s16, 1
      %p225 = scmp.lt.s32.totalorder %s222, 1
      %s226 = scalar_select %p225, %s222, 1
      %s227 = smul.addr %s224, 2
      %s228 = sadd.s32 %s226, %s227
      %s229 = smul.addr %s228, 4
      %s230 = scalar_lea.vmem %s1, %s229
      // Predicated region
      $region25: #{binarize_pred.1} parent=23 // pred_check
        %p231 = pneg %p72
      $region26: #{binarize_pred.1} parent=23 // pred_check_branch
        %233 = sbr.rel (%p231) target = $region28
      $region27: #{binarize_pred.1} parent=23 // pred_region
        %s234 = smul.u32 2, %s17
      $region28: #{binarize_pred.1} parent=23 // pred_fallthru
        _
    $region24: #{binarize_pred.1} parent=5 // pred_fallthru
      _
    %p235 = scmp.le.s32.totalorder 2, %s7
    // Predicated region
    $region29: #{binarize_pred.1} parent=5 // pred_check
      %p236 = pneg %p235
    $region30: #{binarize_pred.1} parent=5 // pred_check_branch
      %238 = sbr.rel (%p236) target = $region32
    $region31: #{binarize_pred.1} parent=5 // pred_region
      %s239 = ssub.s32 %s7, 2
      // Predicated region
      $region33: #{binarize_pred.1} parent=31 // pred_check
        %p240 = pneg %p78
      $region34: #{binarize_pred.1} parent=31 // pred_check_branch
        %242 = sbr.rel (%p240) target = $region36
      $region35: #{binarize_pred.1} parent=31 // pred_region
        %s243 = smul.u32 2, %s19
        %p244 = scmp.lt.s32.totalorder %s18, 1
        %s245 = scalar_select %p244, %s18, 1
        %p246 = scmp.lt.s32.totalorder %s243, 1
        %s247 = scalar_select %p246, %s243, 1
        %s248 = smul.addr %s245, 2
        %s249 = sadd.s32 %s247, %s248
        %s250 = smul.addr %s249, 4
        %s251 = scalar_lea.vmem %s1, %s250
      $region36: #{binarize_pred.1} parent=31 // pred_fallthru
        _
    $region32: #{binarize_pred.1} parent=5 // pred_fallthru
      _
  $region6: #{binarize_pred.1} parent=0 // loop_footer
    %s11 = sadd.s32 1, %s7
  $region7: #{binarize_pred.1} parent=0 // loop_footer_branch
    %6 = sbr.rel target = $region3
  $region8: #{binarize_pred.1} parent=0 // loop_exit
    _

</llo_original>
